<compile_context>
chip_gen: v5e
topology: v5e:2x2
jax: 0.10.0
libtpu: 0.0.40
codegen_flags: <defaults>
</compile_context>

<pallas_src>
import functools

import jax
import jax.numpy as jnp
from jax import lax
from jax.experimental import pallas as pl
from jax.experimental.pallas import tpu as pltpu

BN_EPS = 1e-5


def _round_up(a, m):
    return -(-a // m) * m


# ---------------------------------------------------------------------------
# In-kernel helpers
# ---------------------------------------------------------------------------
def _masked_ones_row(tile_rows, n_valid, row_offset):
    """[1, tile_rows] f32 row: 1.0 where the global row index < n_valid else 0."""
    row = lax.broadcasted_iota(jnp.int32, (1, tile_rows), 1) + row_offset
    return (row < n_valid).astype(jnp.float32)


def _col_stats8(h, ones):
    """[8, P] slab: row 0 = masked column sum, row 1 = masked column sum-of-sq."""
    s = jnp.dot(ones, h, preferred_element_type=jnp.float32)
    ss = jnp.dot(ones, h * h, preferred_element_type=jnp.float32)
    pad = jnp.zeros((6, h.shape[1]), jnp.float32)
    return jnp.concatenate([s, ss, pad], axis=0)


# ---------------------------------------------------------------------------
# Fused whole-batch kernel (fast path, everything resident in VMEM)
# ---------------------------------------------------------------------------
def _fused_kernel(x_ref, w1_ref, w2_ref, w3_ref, b3_ref,
                  g1_ref, be1_ref, g2_ref, be2_ref, o_ref, *, n_valid):
    ones = _masked_ones_row(x_ref.shape[0], n_valid, 0)
    inv_n = 1.0 / n_valid

    def bn_relu(h, g, be):
        s = jnp.dot(ones, h, preferred_element_type=jnp.float32)
        ss = jnp.dot(ones, h * h, preferred_element_type=jnp.float32)
        mu = s * inv_n
        var = jnp.maximum(ss * inv_n - mu * mu, 0.0)
        sc = g * lax.rsqrt(var + BN_EPS)
        sh = be - mu * sc
        return jnp.maximum(h * sc + sh, 0.0)

    h1 = jnp.dot(x_ref[...], w1_ref[...], preferred_element_type=jnp.float32)
    a1 = bn_relu(h1, g1_ref[...], be1_ref[...])
    h2 = jnp.dot(a1, w2_ref[...], preferred_element_type=jnp.float32)
    a2 = bn_relu(h2, g2_ref[...], be2_ref[...])
    o_ref[...] = (jnp.dot(a2, w3_ref[...], preferred_element_type=jnp.float32)
                  + b3_ref[...]).astype(o_ref.dtype)


# ---------------------------------------------------------------------------
# Tiled-path kernels
# ---------------------------------------------------------------------------
def _stats1_kernel(x_ref, w1_ref, stats_ref, *, n_valid):
    # Layer-1 statistics only: h1 never leaves VMEM (recomputed in kernel 2).
    h1 = jnp.dot(x_ref[...], w1_ref[...], preferred_element_type=jnp.float32)
    ones = _masked_ones_row(h1.shape[0], n_valid, pl.program_id(0) * h1.shape[0])
    stats_ref[0] = _col_stats8(h1, ones)


def _layer2_kernel(x_ref, w1s_ref, sh1_ref, w2_ref, h2_ref, stats_ref, *, n_valid):
    # a1 = relu(x @ (W1*sc1) + sh1);  h2 = a1 @ W2  (f32 math, bf16 store).
    a1 = jnp.maximum(
        jnp.dot(x_ref[...], w1s_ref[...], preferred_element_type=jnp.float32)
        + sh1_ref[...], 0.0)
    h2 = jnp.dot(a1, w2_ref[...], preferred_element_type=jnp.float32)
    ones = _masked_ones_row(h2.shape[0], n_valid, pl.program_id(0) * h2.shape[0])
    stats_ref[0] = _col_stats8(h2, ones)
    h2_ref[...] = h2.astype(h2_ref.dtype)


def _layer3_kernel(h2_ref, sc2_ref, sh2_ref, w3_ref, b3_ref, o_ref):
    a2 = jnp.maximum(h2_ref[...].astype(jnp.float32) * sc2_ref[...] + sh2_ref[...],
                     0.0)
    o_ref[...] = (jnp.dot(a2, w3_ref[...], preferred_element_type=jnp.float32)
                  + b3_ref[...]).astype(o_ref.dtype)


# ---------------------------------------------------------------------------
# Host-side BN finalization (tiny [1, P] math between pallas_calls)
# ---------------------------------------------------------------------------
def _bn_scale_shift(partial_stats, gamma, beta, n):
    stats = jnp.sum(partial_stats, axis=0)                  # [8, P]
    mu = stats[0:1, :] / n
    var = jnp.maximum(stats[1:2, :] / n - mu * mu, 0.0)     # biased batch variance
    scale = gamma * lax.rsqrt(var + BN_EPS)
    shift = beta - mu * scale
    return scale, shift


# ---------------------------------------------------------------------------
# Forward
# ---------------------------------------------------------------------------
@functools.partial(jax.jit, static_argnames=("tile_n", "fused_max_rows"))
def projector_forward(x, params, *, tile_n=1024, fused_max_rows=4096):
    """x: [N, D] float32. params from init_params (weights stored [in, out])."""
    n, d = x.shape
    p = params["w1"].shape[1]
    f32 = jnp.float32

    # ---------------- fused whole-batch fast path ----------------
    n_pad8 = _round_up(n, 8)
    if n_pad8 <= fused_max_rows:
        xp = jnp.pad(x, ((0, n_pad8 - n), (0, 0))) if n_pad8 != n else x
        out = pl.pallas_call(
            functools.partial(_fused_kernel, n_valid=n),
            out_shape=jax.ShapeDtypeStruct((n_pad8, p), f32),
            compiler_params=pltpu.CompilerParams(vmem_limit_bytes=32 * 1024 * 1024),
        )(xp, params["w1"], params["w2"], params["w3"], params["b3"],
          params["g1"], params["be1"], params["g2"], params["be2"])
        return out[:n]

    # ---------------- batch-tiled 3-call path (large N) ----------------
    # bf16 intermediate -> round tile to 16; keep >= 2 grid steps for v7x megacore.
    tn = max(16, min(_round_up(tile_n, 16), _round_up(-(-n // 2), 16)))
    n_pad = _round_up(n, tn)
    if n_pad != n:
        x = jnp.pad(x, ((0, n_pad - n), (0, 0)))
    g = n_pad // tn
    grid = (g,)

    row_spec = lambda cols: pl.BlockSpec((tn, cols), lambda i: (i, 0))
    const_spec = lambda r, c: pl.BlockSpec((r, c), lambda i: (0, 0))
    stats_spec = pl.BlockSpec((1, 8, p), lambda i: (i, 0, 0))
    parallel = pltpu.CompilerParams(dimension_semantics=("parallel",))

    # layer 1: stats of h1 = x @ W1 only (h1 never written to HBM)
    st1 = pl.pallas_call(
        functools.partial(_stats1_kernel, n_valid=n),
        grid=grid,
        in_specs=[row_spec(d), const_spec(d, p)],
        out_specs=stats_spec,
        out_shape=jax.ShapeDtypeStruct((g, 8, p), f32),
        compiler_params=parallel,
    )(x, params["w1"])
    sc1, sh1 = _bn_scale_shift(st1, params["g1"], params["be1"], n)
    w1s = params["w1"] * sc1          # fold BN-1 scale into W1 (tiny host op)

    # layer 2: a1 = relu(x @ W1s + sh1); h2 = a1 @ W2 (+ stats), h2 stored bf16
    h2, st2 = pl.pallas_call(
        functools.partial(_layer2_kernel, n_valid=n),
        grid=grid,
        in_specs=[row_spec(d), const_spec(d, p), const_spec(1, p),
                  const_spec(p, p)],
        out_specs=(row_spec(p), stats_spec),
        out_shape=(jax.ShapeDtypeStruct((n_pad, p), jnp.bfloat16),
                   jax.ShapeDtypeStruct((g, 8, p), f32)),
        compiler_params=parallel,
    )(x, w1s, sh1, params["w2"])
    sc2, sh2 = _bn_scale_shift(st2, params["g2"], params["be2"], n)

    # layer 3: a2 = relu(BN(h2)); out = a2 @ W3 + b3
    out = pl.pallas_call(
        _layer3_kernel,
        grid=grid,
        in_specs=[row_spec(p), const_spec(1, p), const_spec(1, p),
                  const_spec(p, p), const_spec(1, p)],
        out_specs=row_spec(p),
        out_shape=jax.ShapeDtypeStruct((n_pad, p), f32),
        compiler_params=parallel,
    )(h2, sc2, sh2, params["w3"], params["b3"])

    return out[:n]


# ---------------------------------------------------------------------------
# Params + pure-JAX reference (mirrors the PyTorch forward, training-mode BN)
# ---------------------------------------------------------------------------
def init_params(key, D=32, proj_dim=128):
    """Deterministic PyTorch-style init. Linear weights stored as [in, out]."""
    ks = jax.random.split(key, 6)

    def linear(kw, kb, fan_in, fan_out):
        bound = 1.0 / jnp.sqrt(fan_in)
        w = jax.random.uniform(kw, (fan_in, fan_out), jnp.float32, -bound, bound)
        b = jax.random.uniform(kb, (1, fan_out), jnp.float32, -bound, bound)
        return w, b

    w1, b1 = linear(ks[0], ks[1], D, proj_dim)
    w2, b2 = linear(ks[2], ks[3], proj_dim, proj_dim)
    w3, b3 = linear(ks[4], ks[5], proj_dim, proj_dim)

    ones = jnp.ones((1, proj_dim), jnp.float32)
    zeros = jnp.zeros((1, proj_dim), jnp.float32)
    return dict(
        w1=w1, b1=b1, g1=ones, be1=zeros,
        w2=w2, b2=b2, g2=ones, be2=zeros,
        w3=w3, b3=b3,
    )


def projector_reference(x, p):
    # TODO(synk): training-mode BN only; eval-mode (running stats) not modeled.
    def bn_relu(h, g, b):
        mu = jnp.mean(h, axis=0, keepdims=True)
        var = jnp.mean((h - mu) ** 2, axis=0, keepdims=True)
        return jnp.maximum((h - mu) / jnp.sqrt(var + BN_EPS) * g + b, 0.0)

    h = x @ p["w1"] + p["b1"]          # b1/b2 cancel under batch-stat BN
    h = bn_relu(h, p["g1"], p["be1"])
    h = h @ p["w2"] + p["b2"]
    h = bn_relu(h, p["g2"], p["be2"])
    return h @ p["w3"] + p["b3"]


if __name__ == "__main__":
    # Small shapes consistent with Linear(D, proj_dim).  N=200 exercises ragged
    # masking; the second call forces the batch-tiled (multi-grid-step) path.
    N, D, PROJ = 200, 32, 128

    key = jax.random.PRNGKey(0)
    kx, kp = jax.random.split(key)
    x = jax.random.normal(kx, (N, D), dtype=jnp.float32)
    params = init_params(kp, D=D, proj_dim=PROJ)

    ref = projector_reference(x, params)

    # Fused whole-batch fast path (all-f32, tight tolerance).
    out_fused = jax.block_until_ready(projector_forward(x, params))
    assert out_fused.shape == (N, PROJ)
    assert jnp.allclose(out_fused, ref, atol=1e-4, rtol=1e-4), \
        float(jnp.max(jnp.abs(out_fused - ref)))

    # Batch-tiled path (forced): bf16 h2 intermediate -> slightly looser tolerance.
    out_tiled = jax.block_until_ready(
        projector_forward(x, params, tile_n=64, fused_max_rows=0))
    assert out_tiled.shape == (N, PROJ)
    assert jnp.allclose(out_tiled, ref, atol=3e-2, rtol=3e-2), \
        float(jnp.max(jnp.abs(out_tiled - ref)))

    print("KERNEL_OK")
</pallas_src>

<mosaic_0001>
module attributes {stable_mosaic.version = 11 : i64} {
  func.func @_fused_kernel(%arg0: memref<200x32xf32, #tpu.memory_space<vmem>>, %arg1: memref<32x128xf32, #tpu.memory_space<vmem>>, %arg2: memref<128x128xf32, #tpu.memory_space<vmem>>, %arg3: memref<128x128xf32, #tpu.memory_space<vmem>>, %arg4: memref<1x128xf32, #tpu.memory_space<vmem>>, %arg5: memref<1x128xf32, #tpu.memory_space<vmem>>, %arg6: memref<1x128xf32, #tpu.memory_space<vmem>>, %arg7: memref<1x128xf32, #tpu.memory_space<vmem>>, %arg8: memref<1x128xf32, #tpu.memory_space<vmem>>, %arg9: memref<200x128xf32, #tpu.memory_space<vmem>>) attributes {dimension_semantics = [], scalar_prefetch = 0 : i64, scratch_operands = 0 : i64, tpu.core_type = #tpu.core_type<tc>} {
    %0 = tpu.iota {dimensions = array<i32: 1>} : vector<1x200xi32>
    %c0_i32 = arith.constant 0 : i32
    %1 = vector.broadcast %c0_i32 : i32 to vector<1x200xi32>
    %2 = arith.addi %0, %1 : vector<1x200xi32>
    %c200_i32 = arith.constant 200 : i32
    %3 = vector.broadcast %c200_i32 : i32 to vector<1x200xi32>
    %4 = arith.cmpi slt, %2, %3 : vector<1x200xi32>
    %5 = arith.extui %4 : vector<1x200xi1> to vector<1x200xi32>
    %6 = arith.sitofp %5 : vector<1x200xi32> to vector<1x200xf32>
    %c0 = arith.constant 0 : index
    %c0_0 = arith.constant 0 : index
    %7 = vector.load %arg0[%c0, %c0_0] : memref<200x32xf32, #tpu.memory_space<vmem>>, vector<200x32xf32>
    %c0_1 = arith.constant 0 : index
    %c0_2 = arith.constant 0 : index
    %8 = vector.load %arg1[%c0_1, %c0_2] : memref<32x128xf32, #tpu.memory_space<vmem>>, vector<32x128xf32>
    %cst = arith.constant dense<0.000000e+00> : vector<200x128xf32>
    %9 = tpu.matmul %7, %8, %cst {dimension_numbers = #tpu.dot_dimension_numbers<[1], [0], [0], [1], [0, 0, 1, 1], [], []>} : vector<200x32xf32>, vector<32x128xf32>, vector<200x128xf32> -> vector<200x128xf32>
    %c0_3 = arith.constant 0 : index
    %c0_4 = arith.constant 0 : index
    %10 = vector.load %arg5[%c0_3, %c0_4] : memref<1x128xf32, #tpu.memory_space<vmem>>, vector<1x128xf32>
    %c0_5 = arith.constant 0 : index
    %c0_6 = arith.constant 0 : index
    %11 = vector.load %arg6[%c0_5, %c0_6] : memref<1x128xf32, #tpu.memory_space<vmem>>, vector<1x128xf32>
    %cst_7 = arith.constant dense<0.000000e+00> : vector<1x128xf32>
    %12 = tpu.matmul %6, %9, %cst_7 {dimension_numbers = #tpu.dot_dimension_numbers<[1], [0], [0], [1], [0, 0, 1, 1], [], []>} : vector<1x200xf32>, vector<200x128xf32>, vector<1x128xf32> -> vector<1x128xf32>
    %13 = arith.mulf %9, %9 : vector<200x128xf32>
    %cst_8 = arith.constant dense<0.000000e+00> : vector<1x128xf32>
    %14 = tpu.matmul %6, %13, %cst_8 {dimension_numbers = #tpu.dot_dimension_numbers<[1], [0], [0], [1], [0, 0, 1, 1], [], []>} : vector<1x200xf32>, vector<200x128xf32>, vector<1x128xf32> -> vector<1x128xf32>
    %cst_9 = arith.constant 5.000000e-03 : f32
    %15 = vector.broadcast %cst_9 : f32 to vector<1x128xf32>
    %16 = arith.mulf %12, %15 : vector<1x128xf32>
    %cst_10 = arith.constant 5.000000e-03 : f32
    %17 = vector.broadcast %cst_10 : f32 to vector<1x128xf32>
    %18 = arith.mulf %14, %17 : vector<1x128xf32>
    %19 = arith.mulf %16, %16 : vector<1x128xf32>
    %20 = arith.subf %18, %19 : vector<1x128xf32>
    %cst_11 = arith.constant 0.000000e+00 : f32
    %21 = vector.broadcast %cst_11 : f32 to vector<1x128xf32>
    %22 = arith.maximumf %20, %21 : vector<1x128xf32>
    %cst_12 = arith.constant 9.99999974E-6 : f32
    %23 = vector.broadcast %cst_12 : f32 to vector<1x128xf32>
    %24 = arith.addf %22, %23 : vector<1x128xf32>
    %25 = math.rsqrt %24 : vector<1x128xf32>
    %26 = arith.mulf %10, %25 : vector<1x128xf32>
    %27 = arith.mulf %16, %26 : vector<1x128xf32>
    %28 = arith.subf %11, %27 : vector<1x128xf32>
    %29 = vector.broadcast %26 : vector<1x128xf32> to vector<200x128xf32>
    %30 = arith.mulf %9, %29 : vector<200x128xf32>
    %31 = vector.broadcast %28 : vector<1x128xf32> to vector<200x128xf32>
    %32 = arith.addf %30, %31 : vector<200x128xf32>
    %cst_13 = arith.constant 0.000000e+00 : f32
    %33 = vector.broadcast %cst_13 : f32 to vector<200x128xf32>
    %34 = arith.maximumf %32, %33 : vector<200x128xf32>
    %c0_14 = arith.constant 0 : index
    %c0_15 = arith.constant 0 : index
    %35 = vector.load %arg2[%c0_14, %c0_15] : memref<128x128xf32, #tpu.memory_space<vmem>>, vector<128x128xf32>
    %cst_16 = arith.constant dense<0.000000e+00> : vector<200x128xf32>
    %36 = tpu.matmul %34, %35, %cst_16 {dimension_numbers = #tpu.dot_dimension_numbers<[1], [0], [0], [1], [0, 0, 1, 1], [], []>} : vector<200x128xf32>, vector<128x128xf32>, vector<200x128xf32> -> vector<200x128xf32>
    %c0_17 = arith.constant 0 : index
    %c0_18 = arith.constant 0 : index
    %37 = vector.load %arg7[%c0_17, %c0_18] : memref<1x128xf32, #tpu.memory_space<vmem>>, vector<1x128xf32>
    %c0_19 = arith.constant 0 : index
    %c0_20 = arith.constant 0 : index
    %38 = vector.load %arg8[%c0_19, %c0_20] : memref<1x128xf32, #tpu.memory_space<vmem>>, vector<1x128xf32>
    %cst_21 = arith.constant dense<0.000000e+00> : vector<1x128xf32>
    %39 = tpu.matmul %6, %36, %cst_21 {dimension_numbers = #tpu.dot_dimension_numbers<[1], [0], [0], [1], [0, 0, 1, 1], [], []>} : vector<1x200xf32>, vector<200x128xf32>, vector<1x128xf32> -> vector<1x128xf32>
    %40 = arith.mulf %36, %36 : vector<200x128xf32>
    %cst_22 = arith.constant dense<0.000000e+00> : vector<1x128xf32>
    %41 = tpu.matmul %6, %40, %cst_22 {dimension_numbers = #tpu.dot_dimension_numbers<[1], [0], [0], [1], [0, 0, 1, 1], [], []>} : vector<1x200xf32>, vector<200x128xf32>, vector<1x128xf32> -> vector<1x128xf32>
    %cst_23 = arith.constant 5.000000e-03 : f32
    %42 = vector.broadcast %cst_23 : f32 to vector<1x128xf32>
    %43 = arith.mulf %39, %42 : vector<1x128xf32>
    %cst_24 = arith.constant 5.000000e-03 : f32
    %44 = vector.broadcast %cst_24 : f32 to vector<1x128xf32>
    %45 = arith.mulf %41, %44 : vector<1x128xf32>
    %46 = arith.mulf %43, %43 : vector<1x128xf32>
    %47 = arith.subf %45, %46 : vector<1x128xf32>
    %cst_25 = arith.constant 0.000000e+00 : f32
    %48 = vector.broadcast %cst_25 : f32 to vector<1x128xf32>
    %49 = arith.maximumf %47, %48 : vector<1x128xf32>
    %cst_26 = arith.constant 9.99999974E-6 : f32
    %50 = vector.broadcast %cst_26 : f32 to vector<1x128xf32>
    %51 = arith.addf %49, %50 : vector<1x128xf32>
    %52 = math.rsqrt %51 : vector<1x128xf32>
    %53 = arith.mulf %37, %52 : vector<1x128xf32>
    %54 = arith.mulf %43, %53 : vector<1x128xf32>
    %55 = arith.subf %38, %54 : vector<1x128xf32>
    %56 = vector.broadcast %53 : vector<1x128xf32> to vector<200x128xf32>
    %57 = arith.mulf %36, %56 : vector<200x128xf32>
    %58 = vector.broadcast %55 : vector<1x128xf32> to vector<200x128xf32>
    %59 = arith.addf %57, %58 : vector<200x128xf32>
    %cst_27 = arith.constant 0.000000e+00 : f32
    %60 = vector.broadcast %cst_27 : f32 to vector<200x128xf32>
    %61 = arith.maximumf %59, %60 : vector<200x128xf32>
    %c0_28 = arith.constant 0 : index
    %c0_29 = arith.constant 0 : index
    %62 = vector.load %arg3[%c0_28, %c0_29] : memref<128x128xf32, #tpu.memory_space<vmem>>, vector<128x128xf32>
    %cst_30 = arith.constant dense<0.000000e+00> : vector<200x128xf32>
    %63 = tpu.matmul %61, %62, %cst_30 {dimension_numbers = #tpu.dot_dimension_numbers<[1], [0], [0], [1], [0, 0, 1, 1], [], []>} : vector<200x128xf32>, vector<128x128xf32>, vector<200x128xf32> -> vector<200x128xf32>
    %c0_31 = arith.constant 0 : index
    %c0_32 = arith.constant 0 : index
    %64 = vector.load %arg4[%c0_31, %c0_32] : memref<1x128xf32, #tpu.memory_space<vmem>>, vector<1x128xf32>
    %65 = vector.broadcast %64 : vector<1x128xf32> to vector<200x128xf32>
    %66 = arith.addf %63, %65 : vector<200x128xf32>
    %c0_33 = arith.constant 0 : index
    %c0_34 = arith.constant 0 : index
    %67 = vector.load %arg9[%c0_33, %c0_34] : memref<200x128xf32, #tpu.memory_space<vmem>>, vector<200x128xf32>
    tpu.vector_store %arg9[%c0_33, %c0_34], %66 {strides = array<i32>} : memref<200x128xf32, #tpu.memory_space<vmem>>, vector<200x128xf32>,
    return
  }
}

</mosaic_0001>

<llo_original>
// kernel: projector_forward.1
$region0: #{projector_forward.1}
  #allocation0 [shape = 'u32[]', space=smem, size = 0x4, offset = 0x4, fixed_abs, tag = 'smem constant byte address 0x4 - core index']
  #allocation1 [shape = 'u32[72,128]{1,0:T(1,128)}', space=vmem, size = 0x9000, scoped, tag = 'internal scratch']
  %s0 = inlined_call_operand.vmem [shape: f32[200,32], index: 0, kind: input, shape index: {}]
  %s1 = inlined_call_operand.hbm [shape: f32[32,128], index: 1, kind: input, shape index: {}]
  %s2 = inlined_call_operand.vmem [shape: f32[128,128], index: 2, kind: input, shape index: {}]
  %s3 = inlined_call_operand.vmem [shape: f32[128,128], index: 3, kind: input, shape index: {}]
  %s4 = inlined_call_operand.vmem [shape: f32[1,128], index: 4, kind: input, shape index: {}]
  %s5 = inlined_call_operand.vmem [shape: f32[1,128], index: 5, kind: input, shape index: {}]
  %s6 = inlined_call_operand.vmem [shape: f32[1,128], index: 6, kind: input, shape index: {}]
  %s7 = inlined_call_operand.vmem [shape: f32[1,128], index: 7, kind: input, shape index: {}]
  %s8 = inlined_call_operand.vmem [shape: f32[1,128], index: 8, kind: input, shape index: {}]
  %s9 = inlined_call_operand.hbm [shape: f32[200,128], index: 9, kind: output, shape index: {}]
  %s10 = sld [smem:[#allocation0]]
  $region50: #{projector_forward.1} parent=0
    _
  %s12 = ssub.s32 1, %s10
  %s13 = scalar_select 0, %s12, %s10
  $region1: #{projector_forward.1} parent=0
    #allocation2 [shape = 'u8[16384]{0}', space=vmem, size = 0x4000, scoped, tag = 'input window, operand 1, single buffered']
    #allocation3 [shape = 's32[1]{0}', space=sflag, size = 0x4, scoped, tag = 'scoped memory for projector_forward.1']
    #allocation4 [shape = 's32[1]{0}', space=sflag, size = 0x4, scoped, tag = 'scoped memory for projector_forward.1']
    #allocation5 [shape = 'u8[102400]{0}', space=vmem, size = 0x19000, scoped, tag = 'output window, operand 0, single buffered']
    %14 = vsyncpa [#allocation3], 0
    %15 = vsyncpa [#allocation4], 0
    // Predicated region
    $region2: #{projector_forward.1} parent=1 // pred_check
      _
    $region3: #{projector_forward.1} parent=1 // pred_check_branch
      %17 = sbr.rel (0) target = $region5
    $region4: #{projector_forward.1} parent=1 // pred_region
      _
    $region5: #{projector_forward.1} parent=1 // pred_fallthru
      _
    // Predicated region
    $region6: #{projector_forward.1} parent=1 // pred_check
      _
    $region7: #{projector_forward.1} parent=1 // pred_check_branch
      %19 = sbr.rel (0) target = $region9
    $region8: #{projector_forward.1} parent=1 // pred_region
      %21 = vsyncadd [#allocation3], 0
      %s22 = sshll.u32 %s1, 4
      %s23 = int_to_ptr.hbm [resolvable:$true] %s22
      %s24 = sshll.u32 [#allocation2], 4
      %s25 = int_to_ptr.vmem [resolvable:$true] %s24
      %30 = dma.hbm_to_vmem [thread:$0]  %s23, 512, %s25, [#allocation3], 128, 128, 8
    $region9: #{projector_forward.1} parent=1 // pred_fallthru
      _
    // Predicated region
    $region10: #{projector_forward.1} parent=1 // pred_check
      _
    $region11: #{projector_forward.1} parent=1 // pred_check_branch
      %32 = sbr.rel (0) target = $region13
    $region12: #{projector_forward.1} parent=1 // pred_region
      _
    $region13: #{projector_forward.1} parent=1 // pred_fallthru
      _
    // Predicated region
    $region14: #{projector_forward.1} parent=1 // pred_check
      _
    $region15: #{projector_forward.1} parent=1 // pred_check_branch
      %34 = sbr.rel (0) target = $region17
    $region16: #{projector_forward.1} parent=1 // pred_region
      _
    $region17: #{projector_forward.1} parent=1 // pred_fallthru
      _
    // Predicated region
    $region18: #{projector_forward.1} parent=1 // pred_check
      _
    $region19: #{projector_forward.1} parent=1 // pred_check_branch
      %36 = sbr.rel (0) target = $region21
    $region20: #{projector_forward.1} parent=1 // pred_region
      _
    $region21: #{projector_forward.1} parent=1 // pred_fallthru
      _
    // Predicated region
    $region22: #{projector_forward.1} parent=1 // pred_check
      _
    $region23: #{projector_forward.1} parent=1 // pred_check_branch
      %38 = sbr.rel (0) target = $region25
    $region24: #{projector_forward.1} parent=1 // pred_region
      _
    $region25: #{projector_forward.1} parent=1 // pred_fallthru
      _
    // Predicated region
    $region26: #{projector_forward.1} parent=1 // pred_check
      _
    $region27: #{projector_forward.1} parent=1 // pred_check_branch
      %40 = sbr.rel (0) target = $region29
    $region28: #{projector_forward.1} parent=1 // pred_region
      _
    $region29: #{projector_forward.1} parent=1 // pred_fallthru
      _
    // Predicated region
    $region30: #{projector_forward.1} parent=1 // pred_check
      _
    $region31: #{projector_forward.1} parent=1 // pred_check_branch
      %42 = sbr.rel (0) target = $region33
    $region32: #{projector_forward.1} parent=1 // pred_region
      _
    $region33: #{projector_forward.1} parent=1 // pred_fallthru
      _
    // Predicated region
    $region34: #{projector_forward.1} parent=1 // pred_check
      _
    $region35: #{projector_forward.1} parent=1 // pred_check_branch
      %44 = sbr.rel (0) target = $region37
    $region36: #{projector_forward.1} parent=1 // pred_region
      _
    $region37: #{projector_forward.1} parent=1 // pred_fallthru
      _
    // Predicated region
    $region38: #{projector_forward.1} parent=1 // pred_check
      _
    $region39: #{projector_forward.1} parent=1 // pred_check_branch
      %46 = sbr.rel (0) target = $region41
    $region40: #{projector_forward.1} parent=1 // pred_region
      %48 = dma.done [#allocation3], 512
    $region41: #{projector_forward.1} parent=1 // pred_fallthru
      _
    %v49 = vlaneseq
    %v50 = vand.u32 %v49, 127
    %v51 = vadd.s32 %v50, 128
    %vm52 = vcmp.lt.s32.totalorder %v50, 200
    %vm53 = vcmp.lt.s32.totalorder %v51, 200
    %v54 = vsel %vm52, 1, 0
    %v55 = vsel %vm53, 1, 0
    %v56 = vcvt.s32.f32 %v54
    %v57 = vcvt.s32.f32 %v55
    %v58 = vld [vmem:[%s0] sm:$0xff]
    %v59 = vld [vmem:[%s0 + $0x8] sm:$0xff]
    %v60 = vld [vmem:[%s0 + $0x10] sm:$0xff]
    %v61 = vld [vmem:[%s0 + $0x18] sm:$0xff]
    %v62 = vld [vmem:[%s0 + $0x20] sm:$0xff]
    %v63 = vld [vmem:[%s0 + $0x28] sm:$0xff]
    %v64 = vld [vmem:[%s0 + $0x30] sm:$0xff]
    %v65 = vld [vmem:[%s0 + $0x38] sm:$0xff]
    %v66 = vld [vmem:[%s0 + $0x40] sm:$0xff]
    %v67 = vld [vmem:[%s0 + $0x48] sm:$0xff]
    %v68 = vld [vmem:[%s0 + $0x50] sm:$0xff]
    %v69 = vld [vmem:[%s0 + $0x58] sm:$0xff]
    %v70 = vld [vmem:[%s0 + $0x60] sm:$0xff]
    %v71 = vld [vmem:[%s0 + $0x68] sm:$0xff]
    %v72 = vld [vmem:[%s0 + $0x70] sm:$0xff]
    %v73 = vld [vmem:[%s0 + $0x78] sm:$0xff]
    %v74 = vld [vmem:[%s0 + $0x80] sm:$0xff]
    %v75 = vld [vmem:[%s0 + $0x88] sm:$0xff]
    %v76 = vld [vmem:[%s0 + $0x90] sm:$0xff]
    %v77 = vld [vmem:[%s0 + $0x98] sm:$0xff]
    %v78 = vld [vmem:[%s0 + $0xa0] sm:$0xff]
    %v79 = vld [vmem:[%s0 + $0xa8] sm:$0xff]
    %v80 = vld [vmem:[%s0 + $0xb0] sm:$0xff]
    %v81 = vld [vmem:[%s0 + $0xb8] sm:$0xff]
    %v82 = vld [vmem:[%s0 + $0xc0] sm:$0xff]
    %v83 = vld [vmem:[#allocation2] sm:$0xff]
    %v84 = vld [vmem:[#allocation2 + $0x8] sm:$0xff]
    %v85 = vld [vmem:[#allocation2 + $0x10] sm:$0xff]
    %v86 = vld [vmem:[#allocation2 + $0x18] sm:$0xff]
    %vm87 = vcmask 261120
    %v89 = vsel %vm87, %v58, 0
    %v92 = vsel %vm87, %v59, 0
    %v95 = vsel %vm87, %v60, 0
    %v98 = vsel %vm87, %v61, 0
    %v101 = vsel %vm87, %v62, 0
    %v104 = vsel %vm87, %v63, 0
    %v107 = vsel %vm87, %v64, 0
    %v110 = vsel %vm87, %v65, 0
    %v113 = vsel %vm87, %v66, 0
    %v116 = vsel %vm87, %v67, 0
    %v119 = vsel %vm87, %v68, 0
    %v122 = vsel %vm87, %v69, 0
    %v125 = vsel %vm87, %v70, 0
    %v128 = vsel %vm87, %v71, 0
    %v131 = vsel %vm87, %v72, 0
    %v134 = vsel %vm87, %v73, 0
    %v137 = vsel %vm87, %v74, 0
    %v140 = vsel %vm87, %v75, 0
    %v143 = vsel %vm87, %v76, 0
    %v146 = vsel %vm87, %v77, 0
    %v149 = vsel %vm87, %v78, 0
    %v152 = vsel %vm87, %v79, 0
    %v155 = vsel %vm87, %v80, 0
    %v158 = vsel %vm87, %v81, 0
    %v161 = vsel %vm87, %v82, 0
    %163 = vmatpush.msra.mxu0 0.0
    %164 = vmatpush.msra.mxu0 0.0
    %165 = vmatpush.msra.mxu0 0.0
    %166 = vmatpush.msra.mxu0 0.0
    %167 = vmatpush.msra.mxu0 0.0
    %168 = vmatpush.msra.mxu0 0.0
    %169 = vmatpush.msra.mxu0 0.0
    %170 = vmatpush.msra.mxu0 0.0
    %171 = vmatpush.msra.mxu0 0.0
    %172 = vmatpush.msra.mxu0 0.0
    %173 = vmatpush.msra.mxu0 0.0
    %174 = vmatpush.msra.mxu0 0.0
    %175 = vmatpush.msra.mxu0 %v86
    %176 = vmatpush.msra.mxu0 %v85
    %177 = vmatpush.msra.mxu0 %v84
    %178 = vmatpush.msra.mxu0 %v83
    %179 = vmatmul.f32.gmra.mxu0 %v89
    %v180 = vpop.f32.mrf.mxu0
    %v181 = vadd.f32 0.0, %v180
    %182 = vmatmul.f32.gmra.mxu0 %v92
    %v183 = vpop.f32.mrf.mxu0
    %v184 = vadd.f32 0.0, %v183
    %185 = vmatmul.f32.gmra.mxu0 %v95
    %v186 = vpop.f32.mrf.mxu0
    %v187 = vadd.f32 0.0, %v186
    %188 = vmatmul.f32.gmra.mxu0 %v98
    %v189 = vpop.f32.mrf.mxu0
    %v190 = vadd.f32 0.0, %v189
    %191 = vmatmul.f32.gmra.mxu0 %v101
    %v192 = vpop.f32.mrf.mxu0
    %v193 = vadd.f32 0.0, %v192
    %194 = vmatmul.f32.gmra.mxu0 %v104
    %v195 = vpop.f32.mrf.mxu0
    %v196 = vadd.f32 0.0, %v195
    %197 = vmatmul.f32.gmra.mxu0 %v107
    %v198 = vpop.f32.mrf.mxu0
    %v199 = vadd.f32 0.0, %v198
    %200 = vmatmul.f32.gmra.mxu0 %v110
    %v201 = vpop.f32.mrf.mxu0
    %v202 = vadd.f32 0.0, %v201
    %203 = vmatmul.f32.gmra.mxu0 %v113
    %v204 = vpop.f32.mrf.mxu0
    %v205 = vadd.f32 0.0, %v204
    %206 = vmatmul.f32.gmra.mxu0 %v116
    %v207 = vpop.f32.mrf.mxu0
    %v208 = vadd.f32 0.0, %v207
    %209 = vmatmul.f32.gmra.mxu0 %v119
    %v210 = vpop.f32.mrf.mxu0
    %v211 = vadd.f32 0.0, %v210
    %212 = vmatmul.f32.gmra.mxu0 %v122
    %v213 = vpop.f32.mrf.mxu0
    %v214 = vadd.f32 0.0, %v213
    %215 = vmatmul.f32.gmra.mxu0 %v125
    %v216 = vpop.f32.mrf.mxu0
    %v217 = vadd.f32 0.0, %v216
    %218 = vmatmul.f32.gmra.mxu0 %v128
    %v219 = vpop.f32.mrf.mxu0
    %v220 = vadd.f32 0.0, %v219
    %221 = vmatmul.f32.gmra.mxu0 %v131
    %v222 = vpop.f32.mrf.mxu0
    %v223 = vadd.f32 0.0, %v222
    %224 = vmatmul.f32.gmra.mxu0 %v134
    %v225 = vpop.f32.mrf.mxu0
    %v226 = vadd.f32 0.0, %v225
    %227 = vmatmul.f32.gmra.mxu0 %v137
    %v228 = vpop.f32.mrf.mxu0
    %v229 = vadd.f32 0.0, %v228
    %230 = vmatmul.f32.gmra.mxu0 %v140
    %v231 = vpop.f32.mrf.mxu0
    %v232 = vadd.f32 0.0, %v231
    %233 = vmatmul.f32.gmra.mxu0 %v143
    %v234 = vpop.f32.mrf.mxu0
    %v235 = vadd.f32 0.0, %v234
    %236 = vmatmul.f32.gmra.mxu0 %v146
    %v237 = vpop.f32.mrf.mxu0
    %v238 = vadd.f32 0.0, %v237
    %239 = vmatmul.f32.gmra.mxu0 %v149
    %v240 = vpop.f32.mrf.mxu0
    %v241 = vadd.f32 0.0, %v240
    %242 = vmatmul.f32.gmra.mxu0 %v152
    %v243 = vpop.f32.mrf.mxu0
    %v244 = vadd.f32 0.0, %v243
    %245 = vmatmul.f32.gmra.mxu0 %v155
    %v246 = vpop.f32.mrf.mxu0
    %v247 = vadd.f32 0.0, %v246
    %248 = vmatmul.f32.gmra.mxu0 %v158
    %v249 = vpop.f32.mrf.mxu0
    %v250 = vadd.f32 0.0, %v249
    %251 = vmatmul.f32.gmra.mxu0 %v161
    %v252 = vpop.f32.mrf.mxu0
    %v253 = vadd.f32 0.0, %v252
    %254 = vdwg.mxu0
    %v255 = vld [vmem:[%s5] sm:$0x1]
    %v256 = vld [vmem:[%s6] sm:$0x1]
    %vm257 = vcmask 588800
    %v259 = vsel %vm257, %v57, 0
    %261 = vmatpush.msra.mxu0 %v226
    %262 = vmatpush.msra.mxu0 %v223
    %263 = vmatpush.msra.mxu0 %v220
    %264 = vmatpush.msra.mxu0 %v217
    %265 = vmatpush.msra.mxu0 %v214
    %266 = vmatpush.msra.mxu0 %v211
    %267 = vmatpush.msra.mxu0 %v208
    %268 = vmatpush.msra.mxu0 %v205
    %269 = vmatpush.msra.mxu0 %v202
    %270 = vmatpush.msra.mxu0 %v199
    %271 = vmatpush.msra.mxu0 %v196
    %272 = vmatpush.msra.mxu0 %v193
    %273 = vmatpush.msra.mxu0 %v190
    %274 = vmatpush.msra.mxu0 %v187
    %275 = vmatpush.msra.mxu0 %v184
    %276 = vmatpush.msra.mxu0 %v181
    %277 = vmatmul.f32.gmra.mxu0 %v56
    %v278 = vpop.f32.mrf.mxu0
    %v279 = vadd.f32 0.0, %v278
    %280 = vdwg.mxu0
    %281 = vmatpush.msra.mxu0 0.0
    %282 = vmatpush.msra.mxu0 0.0
    %283 = vmatpush.msra.mxu0 0.0
    %284 = vmatpush.msra.mxu0 0.0
    %285 = vmatpush.msra.mxu0 0.0
    %286 = vmatpush.msra.mxu0 0.0
    %287 = vmatpush.msra.mxu0 0.0
    %288 = vmatpush.msra.mxu0 %v253
    %289 = vmatpush.msra.mxu0 %v250
    %290 = vmatpush.msra.mxu0 %v247
    %291 = vmatpush.msra.mxu0 %v244
    %292 = vmatpush.msra.mxu0 %v241
    %293 = vmatpush.msra.mxu0 %v238
    %294 = vmatpush.msra.mxu0 %v235
    %295 = vmatpush.msra.mxu0 %v232
    %296 = vmatpush.msra.mxu0 %v229
    %297 = vmatmul.f32.gmra.mxu0 %v259
    %v298 = vpop.f32.mrf.mxu0
    %v299 = vadd.f32 %v279, %v298
    %300 = vdwg.mxu0
    %v301 = vmul.f32 %v181, %v181
    %v302 = vmul.f32 %v184, %v184
    %v303 = vmul.f32 %v187, %v187
    %v304 = vmul.f32 %v190, %v190
    %v305 = vmul.f32 %v193, %v193
    %v306 = vmul.f32 %v196, %v196
    %v307 = vmul.f32 %v199, %v199
    %v308 = vmul.f32 %v202, %v202
    %v309 = vmul.f32 %v205, %v205
    %v310 = vmul.f32 %v208, %v208
    %v311 = vmul.f32 %v211, %v211
    %v312 = vmul.f32 %v214, %v214
    %v313 = vmul.f32 %v217, %v217
    %v314 = vmul.f32 %v220, %v220
    %v315 = vmul.f32 %v223, %v223
    %v316 = vmul.f32 %v226, %v226
    %v317 = vmul.f32 %v229, %v229
    %v318 = vmul.f32 %v232, %v232
    %v319 = vmul.f32 %v235, %v235
    %v320 = vmul.f32 %v238, %v238
    %v321 = vmul.f32 %v241, %v241
    %v322 = vmul.f32 %v244, %v244
    %v323 = vmul.f32 %v247, %v247
    %v324 = vmul.f32 %v250, %v250
    %v325 = vmul.f32 %v253, %v253
    %326 = vmatpush.msra.mxu0 %v316
    %327 = vmatpush.msra.mxu0 %v315
    %328 = vmatpush.msra.mxu0 %v314
    %329 = vmatpush.msra.mxu0 %v313
    %330 = vmatpush.msra.mxu0 %v312
    %331 = vmatpush.msra.mxu0 %v311
    %332 = vmatpush.msra.mxu0 %v310
    %333 = vmatpush.msra.mxu0 %v309
    %334 = vmatpush.msra.mxu0 %v308
    %335 = vmatpush.msra.mxu0 %v307
    %336 = vmatpush.msra.mxu0 %v306
    %337 = vmatpush.msra.mxu0 %v305
    %338 = vmatpush.msra.mxu0 %v304
    %339 = vmatpush.msra.mxu0 %v303
    %340 = vmatpush.msra.mxu0 %v302
    %341 = vmatpush.msra.mxu0 %v301
    %342 = vmatmul.f32.gmra.mxu0 %v56
    %v343 = vpop.f32.mrf.mxu0
    %v344 = vadd.f32 0.0, %v343
    %345 = vdwg.mxu0
    %346 = vmatpush.msra.mxu0 0.0
    %347 = vmatpush.msra.mxu0 0.0
    %348 = vmatpush.msra.mxu0 0.0
    %349 = vmatpush.msra.mxu0 0.0
    %350 = vmatpush.msra.mxu0 0.0
    %351 = vmatpush.msra.mxu0 0.0
    %352 = vmatpush.msra.mxu0 0.0
    %353 = vmatpush.msra.mxu0 %v325
    %354 = vmatpush.msra.mxu0 %v324
    %355 = vmatpush.msra.mxu0 %v323
    %356 = vmatpush.msra.mxu0 %v322
    %357 = vmatpush.msra.mxu0 %v321
    %358 = vmatpush.msra.mxu0 %v320
    %359 = vmatpush.msra.mxu0 %v319
    %360 = vmatpush.msra.mxu0 %v318
    %361 = vmatpush.msra.mxu0 %v317
    %362 = vmatmul.f32.gmra.mxu0 %v259
    %v363 = vpop.f32.mrf.mxu0
    %v364 = vadd.f32 %v344, %v363
    %365 = vdwg.mxu0
    %v366 = vmul.f32 %v299, 0.005
    %v367 = vmul.f32 %v364, 0.005
    %v368 = vmul.f32 %v366, %v366
    %v369 = vsub.f32 %v367, %v368
    %v370 = vmax.f32 %v369, 0.0
    %v371 = vadd.f32 %v370, 1e-05
    %v372 = vrsqrt.pop %v371
    %v373 = vmul.f32 %v372, %v371
    %v374 = vmul.f32 %v373, %v372
    %v375 = vmul.f32 0.5, %v374
    %v376 = vsub.f32 1.5, %v375
    %v377 = vmul.f32 %v372, %v376
    %vm378 = vweird.f32 %v371
    %vm379 = vweird.f32 %v372
    %vm380 = vmor %vm378, %vm379
    %v381 = vsel %vm380, %v372, %v377
    %v382 = vmul.f32 %v255, %v381
    %v383 = vmul.f32 %v366, %v382
    %v384 = vsub.f32 %v256, %v383
    %v386 = vperm.slane %v382, 0
    %v388 = vmul.f32 %v181, %v386
    %v389 = vmul.f32 %v184, %v386
    %v390 = vmul.f32 %v187, %v386
    %v391 = vmul.f32 %v190, %v386
    %v392 = vmul.f32 %v193, %v386
    %v393 = vmul.f32 %v196, %v386
    %v394 = vmul.f32 %v199, %v386
    %v395 = vmul.f32 %v202, %v386
    %v396 = vmul.f32 %v205, %v386
    %v397 = vmul.f32 %v208, %v386
    %v398 = vmul.f32 %v211, %v386
    %v399 = vmul.f32 %v214, %v386
    %v400 = vmul.f32 %v217, %v386
    %v401 = vmul.f32 %v220, %v386
    %v402 = vmul.f32 %v223, %v386
    %v403 = vmul.f32 %v226, %v386
    %v404 = vmul.f32 %v229, %v386
    %v405 = vmul.f32 %v232, %v386
    %v406 = vmul.f32 %v235, %v386
    %v407 = vmul.f32 %v238, %v386
    %v408 = vmul.f32 %v241, %v386
    %v409 = vmul.f32 %v244, %v386
    %v410 = vmul.f32 %v247, %v386
    %v411 = vmul.f32 %v250, %v386
    %v412 = vmul.f32 %v253, %v386
    %v414 = vperm.slane %v384, 0
    %v416 = vadd.f32 %v388, %v414
    %v417 = vadd.f32 %v389, %v414
    %v418 = vadd.f32 %v390, %v414
    %v419 = vadd.f32 %v391, %v414
    %v420 = vadd.f32 %v392, %v414
    %v421 = vadd.f32 %v393, %v414
    %v422 = vadd.f32 %v394, %v414
    %v423 = vadd.f32 %v395, %v414
    %v424 = vadd.f32 %v396, %v414
    %v425 = vadd.f32 %v397, %v414
    %v426 = vadd.f32 %v398, %v414
    %v427 = vadd.f32 %v399, %v414
    %v428 = vadd.f32 %v400, %v414
    %v429 = vadd.f32 %v401, %v414
    %v430 = vadd.f32 %v402, %v414
    %v431 = vadd.f32 %v403, %v414
    %v432 = vadd.f32 %v404, %v414
    %v433 = vadd.f32 %v405, %v414
    %v434 = vadd.f32 %v406, %v414
    %v435 = vadd.f32 %v407, %v414
    %v436 = vadd.f32 %v408, %v414
    %v437 = vadd.f32 %v409, %v414
    %v438 = vadd.f32 %v410, %v414
    %v439 = vadd.f32 %v411, %v414
    %v440 = vadd.f32 %v412, %v414
    %v441 = vmax.f32 %v416, 0.0
    %v442 = vmax.f32 %v417, 0.0
    %v443 = vmax.f32 %v418, 0.0
    %v444 = vmax.f32 %v419, 0.0
    %v445 = vmax.f32 %v420, 0.0
    %v446 = vmax.f32 %v421, 0.0
    %v447 = vmax.f32 %v422, 0.0
    %v448 = vmax.f32 %v423, 0.0
    %v449 = vmax.f32 %v424, 0.0
    %v450 = vmax.f32 %v425, 0.0
    %v451 = vmax.f32 %v426, 0.0
    %v452 = vmax.f32 %v427, 0.0
    %v453 = vmax.f32 %v428, 0.0
    %v454 = vmax.f32 %v429, 0.0
    %v455 = vmax.f32 %v430, 0.0
    %v456 = vmax.f32 %v431, 0.0
    %v457 = vmax.f32 %v432, 0.0
    %v458 = vmax.f32 %v433, 0.0
    %v459 = vmax.f32 %v434, 0.0
    %v460 = vmax.f32 %v435, 0.0
    %v461 = vmax.f32 %v436, 0.0
    %v462 = vmax.f32 %v437, 0.0
    %v463 = vmax.f32 %v438, 0.0
    %v464 = vmax.f32 %v439, 0.0
    %v465 = vmax.f32 %v440, 0.0
    %v466 = vld [vmem:[%s2] sm:$0xff]
    %v467 = vld [vmem:[%s2 + $0x8] sm:$0xff]
    %v468 = vld [vmem:[%s2 + $0x10] sm:$0xff]
    %v469 = vld [vmem:[%s2 + $0x18] sm:$0xff]
    %v470 = vld [vmem:[%s2 + $0x20] sm:$0xff]
    %v471 = vld [vmem:[%s2 + $0x28] sm:$0xff]
    %v472 = vld [vmem:[%s2 + $0x30] sm:$0xff]
    %v473 = vld [vmem:[%s2 + $0x38] sm:$0xff]
    %v474 = vld [vmem:[%s2 + $0x40] sm:$0xff]
    %v475 = vld [vmem:[%s2 + $0x48] sm:$0xff]
    %v476 = vld [vmem:[%s2 + $0x50] sm:$0xff]
    %v477 = vld [vmem:[%s2 + $0x58] sm:$0xff]
    %v478 = vld [vmem:[%s2 + $0x60] sm:$0xff]
    %v479 = vld [vmem:[%s2 + $0x68] sm:$0xff]
    %v480 = vld [vmem:[%s2 + $0x70] sm:$0xff]
    %v481 = vld [vmem:[%s2 + $0x78] sm:$0xff]
    %482 = vmatpush.msra.mxu0 %v481
    %483 = vmatpush.msra.mxu0 %v480
    %484 = vmatpush.msra.mxu0 %v479
    %485 = vmatpush.msra.mxu0 %v478
    %486 = vmatpush.msra.mxu0 %v477
    %487 = vmatpush.msra.mxu0 %v476
    %488 = vmatpush.msra.mxu0 %v475
    %489 = vmatpush.msra.mxu0 %v474
    %490 = vmatpush.msra.mxu0 %v473
    %491 = vmatpush.msra.mxu0 %v472
    %492 = vmatpush.msra.mxu0 %v471
    %493 = vmatpush.msra.mxu0 %v470
    %494 = vmatpush.msra.mxu0 %v469
    %495 = vmatpush.msra.mxu0 %v468
    %496 = vmatpush.msra.mxu0 %v467
    %497 = vmatpush.msra.mxu0 %v466
    %498 = vmatmul.f32.gmra.mxu0 %v441
    %v499 = vpop.f32.mrf.mxu0
    %v500 = vadd.f32 0.0, %v499
    %501 = vmatmul.f32.gmra.mxu0 %v442
    %v502 = vpop.f32.mrf.mxu0
    %v503 = vadd.f32 0.0, %v502
    %504 = vmatmul.f32.gmra.mxu0 %v443
    %v505 = vpop.f32.mrf.mxu0
    %v506 = vadd.f32 0.0, %v505
    %507 = vmatmul.f32.gmra.mxu0 %v444
    %v508 = vpop.f32.mrf.mxu0
    %v509 = vadd.f32 0.0, %v508
    %510 = vmatmul.f32.gmra.mxu0 %v445
    %v511 = vpop.f32.mrf.mxu0
    %v512 = vadd.f32 0.0, %v511
    %513 = vmatmul.f32.gmra.mxu0 %v446
    %v514 = vpop.f32.mrf.mxu0
    %v515 = vadd.f32 0.0, %v514
    %516 = vmatmul.f32.gmra.mxu0 %v447
    %v517 = vpop.f32.mrf.mxu0
    %v518 = vadd.f32 0.0, %v517
    %519 = vmatmul.f32.gmra.mxu0 %v448
    %v520 = vpop.f32.mrf.mxu0
    %v521 = vadd.f32 0.0, %v520
    %522 = vmatmul.f32.gmra.mxu0 %v449
    %v523 = vpop.f32.mrf.mxu0
    %v524 = vadd.f32 0.0, %v523
    %525 = vmatmul.f32.gmra.mxu0 %v450
    %v526 = vpop.f32.mrf.mxu0
    %v527 = vadd.f32 0.0, %v526
    %528 = vmatmul.f32.gmra.mxu0 %v451
    %v529 = vpop.f32.mrf.mxu0
    %v530 = vadd.f32 0.0, %v529
    %531 = vmatmul.f32.gmra.mxu0 %v452
    %v532 = vpop.f32.mrf.mxu0
    %v533 = vadd.f32 0.0, %v532
    %534 = vmatmul.f32.gmra.mxu0 %v453
    %v535 = vpop.f32.mrf.mxu0
    %v536 = vadd.f32 0.0, %v535
    %537 = vmatmul.f32.gmra.mxu0 %v454
    %v538 = vpop.f32.mrf.mxu0
    %v539 = vadd.f32 0.0, %v538
    %540 = vmatmul.f32.gmra.mxu0 %v455
    %v541 = vpop.f32.mrf.mxu0
    %v542 = vadd.f32 0.0, %v541
    %543 = vmatmul.f32.gmra.mxu0 %v456
    %v544 = vpop.f32.mrf.mxu0
    %v545 = vadd.f32 0.0, %v544
    %546 = vmatmul.f32.gmra.mxu0 %v457
    %v547 = vpop.f32.mrf.mxu0
    %v548 = vadd.f32 0.0, %v547
    %549 = vmatmul.f32.gmra.mxu0 %v458
    %v550 = vpop.f32.mrf.mxu0
    %v551 = vadd.f32 0.0, %v550
    %552 = vmatmul.f32.gmra.mxu0 %v459
    %v553 = vpop.f32.mrf.mxu0
    %v554 = vadd.f32 0.0, %v553
    %555 = vmatmul.f32.gmra.mxu0 %v460
    %v556 = vpop.f32.mrf.mxu0
    %v557 = vadd.f32 0.0, %v556
    %558 = vmatmul.f32.gmra.mxu0 %v461
    %v559 = vpop.f32.mrf.mxu0
    %v560 = vadd.f32 0.0, %v559
    %561 = vmatmul.f32.gmra.mxu0 %v462
    %v562 = vpop.f32.mrf.mxu0
    %v563 = vadd.f32 0.0, %v562
    %564 = vmatmul.f32.gmra.mxu0 %v463
    %v565 = vpop.f32.mrf.mxu0
    %v566 = vadd.f32 0.0, %v565
    %567 = vmatmul.f32.gmra.mxu0 %v464
    %v568 = vpop.f32.mrf.mxu0
    %v569 = vadd.f32 0.0, %v568
    %570 = vmatmul.f32.gmra.mxu0 %v465
    %v571 = vpop.f32.mrf.mxu0
    %v572 = vadd.f32 0.0, %v571
    %573 = vdwg.mxu0
    %v574 = vld [vmem:[%s7] sm:$0x1]
    %v575 = vld [vmem:[%s8] sm:$0x1]
    %576 = vmatpush.msra.mxu0 %v545
    %577 = vmatpush.msra.mxu0 %v542
    %578 = vmatpush.msra.mxu0 %v539
    %579 = vmatpush.msra.mxu0 %v536
    %580 = vmatpush.msra.mxu0 %v533
    %581 = vmatpush.msra.mxu0 %v530
    %582 = vmatpush.msra.mxu0 %v527
    %583 = vmatpush.msra.mxu0 %v524
    %584 = vmatpush.msra.mxu0 %v521
    %585 = vmatpush.msra.mxu0 %v518
    %586 = vmatpush.msra.mxu0 %v515
    %587 = vmatpush.msra.mxu0 %v512
    %588 = vmatpush.msra.mxu0 %v509
    %589 = vmatpush.msra.mxu0 %v506
    %590 = vmatpush.msra.mxu0 %v503
    %591 = vmatpush.msra.mxu0 %v500
    %592 = vmatmul.f32.gmra.mxu0 %v56
    %v593 = vpop.f32.mrf.mxu0
    %v594 = vadd.f32 0.0, %v593
    %595 = vdwg.mxu0
    %596 = vmatpush.msra.mxu0 0.0
    %597 = vmatpush.msra.mxu0 0.0
    %598 = vmatpush.msra.mxu0 0.0
    %599 = vmatpush.msra.mxu0 0.0
    %600 = vmatpush.msra.mxu0 0.0
    %601 = vmatpush.msra.mxu0 0.0
    %602 = vmatpush.msra.mxu0 0.0
    %603 = vmatpush.msra.mxu0 %v572
    %604 = vmatpush.msra.mxu0 %v569
    %605 = vmatpush.msra.mxu0 %v566
    %606 = vmatpush.msra.mxu0 %v563
    %607 = vmatpush.msra.mxu0 %v560
    %608 = vmatpush.msra.mxu0 %v557
    %609 = vmatpush.msra.mxu0 %v554
    %610 = vmatpush.msra.mxu0 %v551
    %611 = vmatpush.msra.mxu0 %v548
    %612 = vmatmul.f32.gmra.mxu0 %v259
    %v613 = vpop.f32.mrf.mxu0
    %v614 = vadd.f32 %v594, %v613
    %615 = vdwg.mxu0
    %v616 = vmul.f32 %v500, %v500
    %v617 = vmul.f32 %v503, %v503
    %v618 = vmul.f32 %v506, %v506
    %v619 = vmul.f32 %v509, %v509
    %v620 = vmul.f32 %v512, %v512
    %v621 = vmul.f32 %v515, %v515
    %v622 = vmul.f32 %v518, %v518
    %v623 = vmul.f32 %v521, %v521
    %v624 = vmul.f32 %v524, %v524
    %v625 = vmul.f32 %v527, %v527
    %v626 = vmul.f32 %v530, %v530
    %v627 = vmul.f32 %v533, %v533
    %v628 = vmul.f32 %v536, %v536
    %v629 = vmul.f32 %v539, %v539
    %v630 = vmul.f32 %v542, %v542
    %v631 = vmul.f32 %v545, %v545
    %v632 = vmul.f32 %v548, %v548
    %v633 = vmul.f32 %v551, %v551
    %v634 = vmul.f32 %v554, %v554
    %v635 = vmul.f32 %v557, %v557
    %v636 = vmul.f32 %v560, %v560
    %v637 = vmul.f32 %v563, %v563
    %v638 = vmul.f32 %v566, %v566
    %v639 = vmul.f32 %v569, %v569
    %v640 = vmul.f32 %v572, %v572
    %641 = vmatpush.msra.mxu0 %v631
    %642 = vmatpush.msra.mxu0 %v630
    %643 = vmatpush.msra.mxu0 %v629
    %644 = vmatpush.msra.mxu0 %v628
    %645 = vmatpush.msra.mxu0 %v627
    %646 = vmatpush.msra.mxu0 %v626
    %647 = vmatpush.msra.mxu0 %v625
    %648 = vmatpush.msra.mxu0 %v624
    %649 = vmatpush.msra.mxu0 %v623
    %650 = vmatpush.msra.mxu0 %v622
    %651 = vmatpush.msra.mxu0 %v621
    %652 = vmatpush.msra.mxu0 %v620
    %653 = vmatpush.msra.mxu0 %v619
    %654 = vmatpush.msra.mxu0 %v618
    %655 = vmatpush.msra.mxu0 %v617
    %656 = vmatpush.msra.mxu0 %v616
    %657 = vmatmul.f32.gmra.mxu0 %v56
    %v658 = vpop.f32.mrf.mxu0
    %v659 = vadd.f32 0.0, %v658
    %660 = vdwg.mxu0
    %661 = vmatpush.msra.mxu0 0.0
    %662 = vmatpush.msra.mxu0 0.0
    %663 = vmatpush.msra.mxu0 0.0
    %664 = vmatpush.msra.mxu0 0.0
    %665 = vmatpush.msra.mxu0 0.0
    %666 = vmatpush.msra.mxu0 0.0
    %667 = vmatpush.msra.mxu0 0.0
    %668 = vmatpush.msra.mxu0 %v640
    %669 = vmatpush.msra.mxu0 %v639
    %670 = vmatpush.msra.mxu0 %v638
    %671 = vmatpush.msra.mxu0 %v637
    %672 = vmatpush.msra.mxu0 %v636
    %673 = vmatpush.msra.mxu0 %v635
    %674 = vmatpush.msra.mxu0 %v634
    %675 = vmatpush.msra.mxu0 %v633
    %676 = vmatpush.msra.mxu0 %v632
    %677 = vmatmul.f32.gmra.mxu0 %v259
    %v678 = vpop.f32.mrf.mxu0
    %v679 = vadd.f32 %v659, %v678
    %680 = vdwg.mxu0
    %v681 = vmul.f32 %v614, 0.005
    %v682 = vmul.f32 %v679, 0.005
    %v683 = vmul.f32 %v681, %v681
    %v684 = vsub.f32 %v682, %v683
    %v685 = vmax.f32 %v684, 0.0
    %v686 = vadd.f32 %v685, 1e-05
    %v687 = vrsqrt.pop %v686
    %v688 = vmul.f32 %v687, %v686
    %v689 = vmul.f32 %v688, %v687
    %v690 = vmul.f32 0.5, %v689
    %v691 = vsub.f32 1.5, %v690
    %v692 = vmul.f32 %v687, %v691
    %vm693 = vweird.f32 %v686
    %vm694 = vweird.f32 %v687
    %vm695 = vmor %vm693, %vm694
    %v696 = vsel %vm695, %v687, %v692
    %v697 = vmul.f32 %v574, %v696
    %v698 = vmul.f32 %v681, %v697
    %v699 = vsub.f32 %v575, %v698
    %v701 = vperm.slane %v697, 0
    %v703 = vmul.f32 %v500, %v701
    %v704 = vmul.f32 %v503, %v701
    %v705 = vmul.f32 %v506, %v701
    %v706 = vmul.f32 %v509, %v701
    %v707 = vmul.f32 %v512, %v701
    %v708 = vmul.f32 %v515, %v701
    %v709 = vmul.f32 %v518, %v701
    %v710 = vmul.f32 %v521, %v701
    %v711 = vmul.f32 %v524, %v701
    %v712 = vmul.f32 %v527, %v701
    %v713 = vmul.f32 %v530, %v701
    %v714 = vmul.f32 %v533, %v701
    %v715 = vmul.f32 %v536, %v701
    %v716 = vmul.f32 %v539, %v701
    %v717 = vmul.f32 %v542, %v701
    %v718 = vmul.f32 %v545, %v701
    %v719 = vmul.f32 %v548, %v701
    %v720 = vmul.f32 %v551, %v701
    %v721 = vmul.f32 %v554, %v701
    %v722 = vmul.f32 %v557, %v701
    %v723 = vmul.f32 %v560, %v701
    %v724 = vmul.f32 %v563, %v701
    %v725 = vmul.f32 %v566, %v701
    %v726 = vmul.f32 %v569, %v701
    %v727 = vmul.f32 %v572, %v701
    %v729 = vperm.slane %v699, 0
    %v731 = vadd.f32 %v703, %v729
    %v732 = vadd.f32 %v704, %v729
    %v733 = vadd.f32 %v705, %v729
    %v734 = vadd.f32 %v706, %v729
    %v735 = vadd.f32 %v707, %v729
    %v736 = vadd.f32 %v708, %v729
    %v737 = vadd.f32 %v709, %v729
    %v738 = vadd.f32 %v710, %v729
    %v739 = vadd.f32 %v711, %v729
    %v740 = vadd.f32 %v712, %v729
    %v741 = vadd.f32 %v713, %v729
    %v742 = vadd.f32 %v714, %v729
    %v743 = vadd.f32 %v715, %v729
    %v744 = vadd.f32 %v716, %v729
    %v745 = vadd.f32 %v717, %v729
    %v746 = vadd.f32 %v718, %v729
    %v747 = vadd.f32 %v719, %v729
    %v748 = vadd.f32 %v720, %v729
    %v749 = vadd.f32 %v721, %v729
    %v750 = vadd.f32 %v722, %v729
    %v751 = vadd.f32 %v723, %v729
    %v752 = vadd.f32 %v724, %v729
    %v753 = vadd.f32 %v725, %v729
    %v754 = vadd.f32 %v726, %v729
    %v755 = vadd.f32 %v727, %v729
    %v756 = vmax.f32 %v731, 0.0
    %v757 = vmax.f32 %v732, 0.0
    %v758 = vmax.f32 %v733, 0.0
    %v759 = vmax.f32 %v734, 0.0
    %v760 = vmax.f32 %v735, 0.0
    %v761 = vmax.f32 %v736, 0.0
    %v762 = vmax.f32 %v737, 0.0
    %v763 = vmax.f32 %v738, 0.0
    %v764 = vmax.f32 %v739, 0.0
    %v765 = vmax.f32 %v740, 0.0
    %v766 = vmax.f32 %v741, 0.0
    %v767 = vmax.f32 %v742, 0.0
    %v768 = vmax.f32 %v743, 0.0
    %v769 = vmax.f32 %v744, 0.0
    %v770 = vmax.f32 %v745, 0.0
    %v771 = vmax.f32 %v746, 0.0
    %v772 = vmax.f32 %v747, 0.0
    %v773 = vmax.f32 %v748, 0.0
    %v774 = vmax.f32 %v749, 0.0
    %v775 = vmax.f32 %v750, 0.0
    %v776 = vmax.f32 %v751, 0.0
    %v777 = vmax.f32 %v752, 0.0
    %v778 = vmax.f32 %v753, 0.0
    %v779 = vmax.f32 %v754, 0.0
    %v780 = vmax.f32 %v755, 0.0
    %v781 = vld [vmem:[%s3] sm:$0xff]
    %v782 = vld [vmem:[%s3 + $0x8] sm:$0xff]
    %v783 = vld [vmem:[%s3 + $0x10] sm:$0xff]
    %v784 = vld [vmem:[%s3 + $0x18] sm:$0xff]
    %v785 = vld [vmem:[%s3 + $0x20] sm:$0xff]
    %v786 = vld [vmem:[%s3 + $0x28] sm:$0xff]
    %v787 = vld [vmem:[%s3 + $0x30] sm:$0xff]
    %v788 = vld [vmem:[%s3 + $0x38] sm:$0xff]
    %v789 = vld [vmem:[%s3 + $0x40] sm:$0xff]
    %v790 = vld [vmem:[%s3 + $0x48] sm:$0xff]
    %v791 = vld [vmem:[%s3 + $0x50] sm:$0xff]
    %v792 = vld [vmem:[%s3 + $0x58] sm:$0xff]
    %v793 = vld [vmem:[%s3 + $0x60] sm:$0xff]
    %v794 = vld [vmem:[%s3 + $0x68] sm:$0xff]
    %v795 = vld [vmem:[%s3 + $0x70] sm:$0xff]
    %v796 = vld [vmem:[%s3 + $0x78] sm:$0xff]
    %v797 = vld [vmem:[%s4] sm:$0x1]
    %v799 = vperm.slane %v797, 0
    %801 = vmatpush.msra.mxu0 %v796
    %802 = vmatpush.msra.mxu0 %v795
    %803 = vmatpush.msra.mxu0 %v794
    %804 = vmatpush.msra.mxu0 %v793
    %805 = vmatpush.msra.mxu0 %v792
    %806 = vmatpush.msra.mxu0 %v791
    %807 = vmatpush.msra.mxu0 %v790
    %808 = vmatpush.msra.mxu0 %v789
    %809 = vmatpush.msra.mxu0 %v788
    %810 = vmatpush.msra.mxu0 %v787
    %811 = vmatpush.msra.mxu0 %v786
    %812 = vmatpush.msra.mxu0 %v785
    %813 = vmatpush.msra.mxu0 %v784
    %814 = vmatpush.msra.mxu0 %v783
    %815 = vmatpush.msra.mxu0 %v782
    %816 = vmatpush.msra.mxu0 %v781
    %817 = vmatmul.f32.gmra.mxu0 %v756
    %v818 = vpop.f32.mrf.mxu0
    %v819 = vadd.f32 %v799, %v818
    %820 = vmatmul.f32.gmra.mxu0 %v757
    %v821 = vpop.f32.mrf.mxu0
    %v822 = vadd.f32 %v799, %v821
    %823 = vmatmul.f32.gmra.mxu0 %v758
    %v824 = vpop.f32.mrf.mxu0
    %v825 = vadd.f32 %v799, %v824
    %826 = vmatmul.f32.gmra.mxu0 %v759
    %v827 = vpop.f32.mrf.mxu0
    %v828 = vadd.f32 %v799, %v827
    %829 = vmatmul.f32.gmra.mxu0 %v760
    %v830 = vpop.f32.mrf.mxu0
    %v831 = vadd.f32 %v799, %v830
    %832 = vmatmul.f32.gmra.mxu0 %v761
    %v833 = vpop.f32.mrf.mxu0
    %v834 = vadd.f32 %v799, %v833
    %835 = vmatmul.f32.gmra.mxu0 %v762
    %v836 = vpop.f32.mrf.mxu0
    %v837 = vadd.f32 %v799, %v836
    %838 = vmatmul.f32.gmra.mxu0 %v763
    %v839 = vpop.f32.mrf.mxu0
    %v840 = vadd.f32 %v799, %v839
    %841 = vmatmul.f32.gmra.mxu0 %v764
    %v842 = vpop.f32.mrf.mxu0
    %v843 = vadd.f32 %v799, %v842
    %844 = vmatmul.f32.gmra.mxu0 %v765
    %v845 = vpop.f32.mrf.mxu0
    %v846 = vadd.f32 %v799, %v845
    %847 = vmatmul.f32.gmra.mxu0 %v766
    %v848 = vpop.f32.mrf.mxu0
    %v849 = vadd.f32 %v799, %v848
    %850 = vmatmul.f32.gmra.mxu0 %v767
    %v851 = vpop.f32.mrf.mxu0
    %v852 = vadd.f32 %v799, %v851
    %853 = vmatmul.f32.gmra.mxu0 %v768
    %v854 = vpop.f32.mrf.mxu0
    %v855 = vadd.f32 %v799, %v854
    %856 = vmatmul.f32.gmra.mxu0 %v769
    %v857 = vpop.f32.mrf.mxu0
    %v858 = vadd.f32 %v799, %v857
    %859 = vmatmul.f32.gmra.mxu0 %v770
    %v860 = vpop.f32.mrf.mxu0
    %v861 = vadd.f32 %v799, %v860
    %862 = vmatmul.f32.gmra.mxu0 %v771
    %v863 = vpop.f32.mrf.mxu0
    %v864 = vadd.f32 %v799, %v863
    %865 = vmatmul.f32.gmra.mxu0 %v772
    %v866 = vpop.f32.mrf.mxu0
    %v867 = vadd.f32 %v799, %v866
    %868 = vmatmul.f32.gmra.mxu0 %v773
    %v869 = vpop.f32.mrf.mxu0
    %v870 = vadd.f32 %v799, %v869
    %871 = vmatmul.f32.gmra.mxu0 %v774
    %v872 = vpop.f32.mrf.mxu0
    %v873 = vadd.f32 %v799, %v872
    %874 = vmatmul.f32.gmra.mxu0 %v775
    %v875 = vpop.f32.mrf.mxu0
    %v876 = vadd.f32 %v799, %v875
    %877 = vmatmul.f32.gmra.mxu0 %v776
    %v878 = vpop.f32.mrf.mxu0
    %v879 = vadd.f32 %v799, %v878
    %880 = vmatmul.f32.gmra.mxu0 %v777
    %v881 = vpop.f32.mrf.mxu0
    %v882 = vadd.f32 %v799, %v881
    %883 = vmatmul.f32.gmra.mxu0 %v778
    %v884 = vpop.f32.mrf.mxu0
    %v885 = vadd.f32 %v799, %v884
    %886 = vmatmul.f32.gmra.mxu0 %v779
    %v887 = vpop.f32.mrf.mxu0
    %v888 = vadd.f32 %v799, %v887
    %889 = vmatmul.f32.gmra.mxu0 %v780
    %v890 = vpop.f32.mrf.mxu0
    %v891 = vadd.f32 %v799, %v890
    %892 = vdwg.mxu0
    %893 = vst [vmem:[#allocation5] sm:$0xff] %v819
    %894 = vst [vmem:[#allocation5 + $0x8] sm:$0xff] %v822
    %895 = vst [vmem:[#allocation5 + $0x10] sm:$0xff] %v825
    %896 = vst [vmem:[#allocation5 + $0x18] sm:$0xff] %v828
    %897 = vst [vmem:[#allocation5 + $0x20] sm:$0xff] %v831
    %898 = vst [vmem:[#allocation5 + $0x28] sm:$0xff] %v834
    %899 = vst [vmem:[#allocation5 + $0x30] sm:$0xff] %v837
    %900 = vst [vmem:[#allocation5 + $0x38] sm:$0xff] %v840
    %901 = vst [vmem:[#allocation5 + $0x40] sm:$0xff] %v843
    %902 = vst [vmem:[#allocation5 + $0x48] sm:$0xff] %v846
    %903 = vst [vmem:[#allocation5 + $0x50] sm:$0xff] %v849
    %904 = vst [vmem:[#allocation5 + $0x58] sm:$0xff] %v852
    %905 = vst [vmem:[#allocation5 + $0x60] sm:$0xff] %v855
    %906 = vst [vmem:[#allocation5 + $0x68] sm:$0xff] %v858
    %907 = vst [vmem:[#allocation5 + $0x70] sm:$0xff] %v861
    %908 = vst [vmem:[#allocation5 + $0x78] sm:$0xff] %v864
    %909 = vst [vmem:[#allocation5 + $0x80] sm:$0xff] %v867
    %910 = vst [vmem:[#allocation5 + $0x88] sm:$0xff] %v870
    %911 = vst [vmem:[#allocation5 + $0x90] sm:$0xff] %v873
    %912 = vst [vmem:[#allocation5 + $0x98] sm:$0xff] %v876
    %913 = vst [vmem:[#allocation5 + $0xa0] sm:$0xff] %v879
    %914 = vst [vmem:[#allocation5 + $0xa8] sm:$0xff] %v882
    %915 = vst [vmem:[#allocation5 + $0xb0] sm:$0xff] %v885
    %916 = vst [vmem:[#allocation5 + $0xb8] sm:$0xff] %v888
    %917 = vst [vmem:[#allocation5 + $0xc0] sm:$0xff] %v891
    // Predicated region
    $region42: #{projector_forward.1} parent=1 // pred_check
      _
    $region43: #{projector_forward.1} parent=1 // pred_check_branch
      %919 = sbr.rel (0) target = $region45
    $region44: #{projector_forward.1} parent=1 // pred_region
      %921 = vsyncadd [#allocation4], 0
      %s922 = sshll.u32 [#allocation5], 4
      %s923 = int_to_ptr.vmem [resolvable:$true] %s922
      %s924 = sshll.u32 %s9, 4
      %s925 = int_to_ptr.hbm [resolvable:$true] %s924
      %930 = dma.vmem_to_hbm [thread:$0]  %s923, 3200, %s925, [#allocation4], 128, 128, 8
    $region45: #{projector_forward.1} parent=1 // pred_fallthru
      _
    // Predicated region
    $region46: #{projector_forward.1} parent=1 // pred_check
      _
    $region47: #{projector_forward.1} parent=1 // pred_check_branch
      %932 = sbr.rel (0) target = $region49
    $region48: #{projector_forward.1} parent=1 // pred_region
      %934 = dma.done [#allocation4], 3200
    $region49: #{projector_forward.1} parent=1 // pred_fallthru
      _
    %935 = vsyncpa [#allocation3], 1
    %936 = vsyncpa [#allocation4], 1

</llo_original>
